<compile_context>
chip_gen: v6e
topology: v6e:2x2x1
jax: 0.10.0
libtpu: 0.0.40
codegen_flags: <defaults>
</compile_context>

<pallas_src>
import jax
import jax.numpy as jnp
from jax.experimental import pallas as pl
from jax.experimental.pallas import tpu as pltpu


def _dann_kernel(x_ref, w_ref, b_ref, o_ref):
    """Fused Linear + Dropout(eval) + ReLU.

    x_ref: (B_pad, K) f32    w_ref: (K, N) f32 or bf16 (pre-transposed)
    b_ref: (1, N) f32        o_ref: (B_pad, N) f32
    """
    x = x_ref[...]
    w = w_ref[...]
    if x.dtype != w.dtype:
        # Cast the tiny activation tile in-register to the (persistently
        # stored) weight dtype; accumulation below is still f32 on the MXU.
        x = x.astype(w.dtype)
    y = jnp.dot(x, w, preferred_element_type=jnp.float32)   # native MXU feed
    y = y + b_ref[...]
    # TODO(synk): Dropout is identity (inference semantics); training-mode
    # dropout would use pltpu.prng_seed / pltpu.prng_random_bits here.
    o_ref[...] = jnp.maximum(y, 0.0).astype(o_ref.dtype)


def prepare_dann_params(weight, bias, *, compute_dtype=None):
    """ONE-TIME parameter preprocessing (init / param-load time, not per call).

    weight: (n_hidden, n_input) f32 — PyTorch nn.Linear layout.
    bias:   (n_hidden,) f32
    compute_dtype: optional persistent storage dtype for the weight
        (e.g. jnp.bfloat16) to halve HBM traffic; output/accum stay f32.

    Returns (weight_kn, bias_2d) ready for `dann_backbone_forward`.
    """
    w_kn = jnp.asarray(weight).T                         # (K, N), amortized
    if compute_dtype is not None:
        w_kn = w_kn.astype(compute_dtype)                # stored in bf16 once
    b_2d = jnp.asarray(bias).reshape(1, -1).astype(jnp.float32)
    return w_kn, b_2d


def dann_backbone_forward(x_nchw, weight_kn, bias_2d):
    """Pallas implementation of DaNNBackbone.forward (eval mode).

    x_nchw:    (B, C, H, W) float32
    weight_kn: (n_input, n_hidden) — from `prepare_dann_params`
    bias_2d:   (1, n_hidden) float32 — from `prepare_dann_params`
    """
    B = x_nchw.shape[0]
    x2d = x_nchw.reshape(B, -1)                          # (B, K); free (row-major)
    K, N = weight_kn.shape
    assert x2d.shape[1] == K
    assert bias_2d.shape == (1, N)

    # Pad batch to the 8-sublane width: unmasked stores, full MXU rows.
    B_pad = max(8, ((B + 7) // 8) * 8)
    if B_pad != B:
        x2d = jnp.pad(x2d, ((0, B_pad - B), (0, 0)))

    bytes_accessed = (
        B_pad * K * x2d.dtype.itemsize
        + K * N * weight_kn.dtype.itemsize
        + N * 4
        + B_pad * N * 4
    )

    vmem = pltpu.MemorySpace.VMEM
    out = pl.pallas_call(
        _dann_kernel,
        out_shape=jax.ShapeDtypeStruct((B_pad, N), jnp.float32),
        # Grid-less: whole operands resident in VMEM, single fused block.
        in_specs=[
            pl.BlockSpec(memory_space=vmem),   # x    (B_pad, K)
            pl.BlockSpec(memory_space=vmem),   # w    (K, N) — pre-transposed
            pl.BlockSpec(memory_space=vmem),   # bias (1, N)
        ],
        out_specs=pl.BlockSpec(memory_space=vmem),
        cost_estimate=pl.CostEstimate(
            flops=2 * B_pad * N * K,
            transcendentals=0,
            bytes_accessed=bytes_accessed,
        ),
    )(x2d, weight_kn, bias_2d)

    return out[:B] if B_pad != B else out


if __name__ == "__main__":
    # Small shapes consistent with the module: NCHW input, n_input = C*H*W.
    B, C, H, W = 2, 4, 16, 16
    n_input = C * H * W          # 1024
    n_hidden = 256

    key = jax.random.PRNGKey(0)
    kx, kw, kb = jax.random.split(key, 3)

    x = jax.random.normal(kx, (B, C, H, W), dtype=jnp.float32)
    # Deterministic init mimicking nn.Linear's uniform(-1/sqrt(fan_in), ...)
    bound = 1.0 / (n_input ** 0.5)
    weight = jax.random.uniform(
        kw, (n_hidden, n_input), minval=-bound, maxval=bound, dtype=jnp.float32
    )
    bias = jax.random.uniform(
        kb, (n_hidden,), minval=-bound, maxval=bound, dtype=jnp.float32
    )

    ref = jnp.maximum(x.reshape(B, -1) @ weight.T + bias, 0.0)

    # f32 path (exact module semantics). Params prepared once, outside hot path.
    w_f32, b2d = prepare_dann_params(weight, bias)
    w_f32, b2d = jax.block_until_ready((w_f32, b2d))
    out = jax.block_until_ready(dann_backbone_forward(x, w_f32, b2d))
    assert out.shape == (B, n_hidden)
    assert jnp.allclose(out, ref, atol=1e-4, rtol=1e-4)

    # bf16 persistent-weight path (halves the weight HBM stream; f32 accum).
    w_bf16, b2d_bf = prepare_dann_params(weight, bias, compute_dtype=jnp.bfloat16)
    w_bf16, b2d_bf = jax.block_until_ready((w_bf16, b2d_bf))
    out_bf16 = jax.block_until_ready(dann_backbone_forward(x, w_bf16, b2d_bf))
    assert out_bf16.shape == (B, n_hidden)
    assert jnp.allclose(out_bf16, ref, atol=5e-2, rtol=5e-2)

    print("KERNEL_OK")
</pallas_src>

<mosaic_0001>
module attributes {stable_mosaic.version = 11 : i64} {
  func.func @_dann_kernel(%arg0: memref<8x1024xf32, #tpu.memory_space<vmem>>, %arg1: memref<1024x256xf32, #tpu.memory_space<vmem>>, %arg2: memref<1x256xf32, #tpu.memory_space<vmem>>, %arg3: memref<8x256xf32, #tpu.memory_space<vmem>>) attributes {dimension_semantics = [], scalar_prefetch = 0 : i64, scratch_operands = 0 : i64, tpu.core_type = #tpu.core_type<tc>} {
    %c0 = arith.constant 0 : index
    %c0_0 = arith.constant 0 : index
    %0 = vector.load %arg0[%c0, %c0_0] : memref<8x1024xf32, #tpu.memory_space<vmem>>, vector<8x1024xf32>
    %c0_1 = arith.constant 0 : index
    %c0_2 = arith.constant 0 : index
    %1 = vector.load %arg1[%c0_1, %c0_2] : memref<1024x256xf32, #tpu.memory_space<vmem>>, vector<1024x256xf32>
    %cst = arith.constant dense<0.000000e+00> : vector<8x256xf32>
    %2 = tpu.matmul %0, %1, %cst {dimension_numbers = #tpu.dot_dimension_numbers<[1], [0], [0], [1], [0, 0, 1, 1], [], []>} : vector<8x1024xf32>, vector<1024x256xf32>, vector<8x256xf32> -> vector<8x256xf32>
    %c0_3 = arith.constant 0 : index
    %c0_4 = arith.constant 0 : index
    %3 = vector.load %arg2[%c0_3, %c0_4] : memref<1x256xf32, #tpu.memory_space<vmem>>, vector<1x256xf32>
    %4 = vector.broadcast %3 : vector<1x256xf32> to vector<8x256xf32>
    %5 = arith.addf %2, %4 : vector<8x256xf32>
    %cst_5 = arith.constant 0.000000e+00 : f32
    %6 = vector.broadcast %cst_5 : f32 to vector<8x256xf32>
    %7 = arith.maximumf %5, %6 : vector<8x256xf32>
    %c0_6 = arith.constant 0 : index
    %c0_7 = arith.constant 0 : index
    %8 = vector.load %arg3[%c0_6, %c0_7] : memref<8x256xf32, #tpu.memory_space<vmem>>, vector<8x256xf32>
    tpu.vector_store %arg3[%c0_6, %c0_7], %7 {strides = array<i32>} : memref<8x256xf32, #tpu.memory_space<vmem>>, vector<8x256xf32>,
    return
  }
}

</mosaic_0001>

<llo_original>
// kernel: tpu_custom_call.1
$region0: #{tpu_custom_call.1}
  #allocation0 [shape = 'u32[]', space=smem, size = 0x4, offset = 0x4, fixed_abs, tag = 'smem constant byte address 0x4 - core index']
  #allocation1 [shape = 'u32[144,128]{1,0:T(1,128)}', space=vmem, size = 0x12000, scoped, tag = 'internal scratch']
  %s0 = inlined_call_operand.hbm [shape: f32[8,1024], index: 0, kind: input, shape index: {}]
  %s1 = inlined_call_operand.hbm [shape: f32[1024,256], index: 1, kind: input, shape index: {}]
  %s2 = inlined_call_operand.vmem [shape: f32[1,256], index: 2, kind: input, shape index: {}]
  %s3 = inlined_call_operand.hbm [shape: f32[8,256], index: 3, kind: output, shape index: {}]
  %s4 = sld [smem:[#allocation0]]
  $region30: #{tpu_custom_call.1} parent=0
    _
  %s6 = ssub.s32 1, %s4
  %s7 = scalar_select 0, %s6, %s4
  $region1: #{tpu_custom_call.1} parent=0
    #allocation2 [shape = 'u8[32768]{0}', space=vmem, size = 0x8000, scoped, tag = 'input window, operand 0, single buffered']
    #allocation3 [shape = 's32[1]{0}', space=sflag, size = 0x4, scoped, tag = 'scoped memory for tpu_custom_call.1']
    #allocation4 [shape = 's32[1]{0}', space=sflag, size = 0x4, scoped, tag = 'scoped memory for tpu_custom_call.1']
    #allocation5 [shape = 'u8[1048576]{0}', space=vmem, size = 0x100000, scoped, tag = 'input window, operand 1, single buffered']
    #allocation6 [shape = 's32[1]{0}', space=sflag, size = 0x4, scoped, tag = 'scoped memory for tpu_custom_call.1']
    #allocation7 [shape = 'u8[8192]{0}', space=vmem, size = 0x2000, scoped, tag = 'output window, operand 0, single buffered']
    %8 = vsyncpa [#allocation3], 0
    %9 = vsyncpa [#allocation6], 0
    %10 = vsyncpa [#allocation4], 0
    // Predicated region
    $region2: #{tpu_custom_call.1} parent=1 // pred_check
      _
    $region3: #{tpu_custom_call.1} parent=1 // pred_check_branch
      %12 = sbr.rel (0) target = $region5
    $region4: #{tpu_custom_call.1} parent=1 // pred_region
      %s14 = ssub.s32 1024, 1024
      %15 = vsyncadd [#allocation3], %s14
      %s17 = sshll.u32 [#allocation2], 4
      %s18 = int_to_ptr.vmem [resolvable:$true] %s17
      %20 = dma.hbm_to_vmem [thread:$0]  %s0, 1024, %s18, [#allocation3]
    $region5: #{tpu_custom_call.1} parent=1 // pred_fallthru
      _
    // Predicated region
    $region6: #{tpu_custom_call.1} parent=1 // pred_check
      _
    $region7: #{tpu_custom_call.1} parent=1 // pred_check_branch
      %22 = sbr.rel (0) target = $region9
    $region8: #{tpu_custom_call.1} parent=1 // pred_region
      %s24 = ssub.s32 32768, 32768
      %25 = vsyncadd [#allocation6], %s24
      %s26 = sshll.u32 [#allocation5], 4
      %s27 = int_to_ptr.vmem [resolvable:$true] %s26
      %32 = dma.hbm_to_vmem [thread:$0]  %s1, 32768, %s27, [#allocation6], 256, 256, 16
    $region9: #{tpu_custom_call.1} parent=1 // pred_fallthru
      _
    // Predicated region
    $region10: #{tpu_custom_call.1} parent=1 // pred_check
      _
    $region11: #{tpu_custom_call.1} parent=1 // pred_check_branch
      %34 = sbr.rel (0) target = $region13
    $region12: #{tpu_custom_call.1} parent=1 // pred_region
      _
    $region13: #{tpu_custom_call.1} parent=1 // pred_fallthru
      _
    // Predicated region
    $region14: #{tpu_custom_call.1} parent=1 // pred_check
      _
    $region15: #{tpu_custom_call.1} parent=1 // pred_check_branch
      %36 = sbr.rel (0) target = $region17
    $region16: #{tpu_custom_call.1} parent=1 // pred_region
      %37 = dma.done [#allocation3], 1024
    $region17: #{tpu_custom_call.1} parent=1 // pred_fallthru
      _
    // Predicated region
    $region18: #{tpu_custom_call.1} parent=1 // pred_check
      _
    $region19: #{tpu_custom_call.1} parent=1 // pred_check_branch
      %39 = sbr.rel (0) target = $region21
    $region20: #{tpu_custom_call.1} parent=1 // pred_region
      %40 = dma.done [#allocation6], 32768
    $region21: #{tpu_custom_call.1} parent=1 // pred_fallthru
      _
    %v41 = vld [vmem:[#allocation2] sm:$0xff]
    %v42 = vld [vmem:[#allocation2 + $0x8] sm:$0xff]
    %v43 = vld [vmem:[#allocation2 + $0x10] sm:$0xff]
    %v44 = vld [vmem:[#allocation2 + $0x18] sm:$0xff]
    %v45 = vld [vmem:[#allocation2 + $0x20] sm:$0xff]
    %v46 = vld [vmem:[#allocation2 + $0x28] sm:$0xff]
    %v47 = vld [vmem:[#allocation2 + $0x30] sm:$0xff]
    %v48 = vld [vmem:[#allocation2 + $0x38] sm:$0xff]
    %v49 = vld [vmem:[#allocation5] sm:$0xff]
    %v50 = vld [vmem:[#allocation5 + $0x8] sm:$0xff]
    %v51 = vld [vmem:[#allocation5 + $0x10] sm:$0xff]
    %v52 = vld [vmem:[#allocation5 + $0x18] sm:$0xff]
    %v53 = vld [vmem:[#allocation5 + $0x20] sm:$0xff]
    %v54 = vld [vmem:[#allocation5 + $0x28] sm:$0xff]
    %v55 = vld [vmem:[#allocation5 + $0x30] sm:$0xff]
    %v56 = vld [vmem:[#allocation5 + $0x38] sm:$0xff]
    %v57 = vld [vmem:[#allocation5 + $0x40] sm:$0xff]
    %v58 = vld [vmem:[#allocation5 + $0x48] sm:$0xff]
    %v59 = vld [vmem:[#allocation5 + $0x50] sm:$0xff]
    %v60 = vld [vmem:[#allocation5 + $0x58] sm:$0xff]
    %v61 = vld [vmem:[#allocation5 + $0x60] sm:$0xff]
    %v62 = vld [vmem:[#allocation5 + $0x68] sm:$0xff]
    %v63 = vld [vmem:[#allocation5 + $0x70] sm:$0xff]
    %v64 = vld [vmem:[#allocation5 + $0x78] sm:$0xff]
    %v65 = vld [vmem:[#allocation5 + $0x80] sm:$0xff]
    %v66 = vld [vmem:[#allocation5 + $0x88] sm:$0xff]
    %v67 = vld [vmem:[#allocation5 + $0x90] sm:$0xff]
    %v68 = vld [vmem:[#allocation5 + $0x98] sm:$0xff]
    %v69 = vld [vmem:[#allocation5 + $0xa0] sm:$0xff]
    %v70 = vld [vmem:[#allocation5 + $0xa8] sm:$0xff]
    %v71 = vld [vmem:[#allocation5 + $0xb0] sm:$0xff]
    %v72 = vld [vmem:[#allocation5 + $0xb8] sm:$0xff]
    %v73 = vld [vmem:[#allocation5 + $0xc0] sm:$0xff]
    %v74 = vld [vmem:[#allocation5 + $0xc8] sm:$0xff]
    %v75 = vld [vmem:[#allocation5 + $0xd0] sm:$0xff]
    %v76 = vld [vmem:[#allocation5 + $0xd8] sm:$0xff]
    %v77 = vld [vmem:[#allocation5 + $0xe0] sm:$0xff]
    %v78 = vld [vmem:[#allocation5 + $0xe8] sm:$0xff]
    %v79 = vld [vmem:[#allocation5 + $0xf0] sm:$0xff]
    %v80 = vld [vmem:[#allocation5 + $0xf8] sm:$0xff]
    %v81 = vld [vmem:[#allocation5 + $0x100] sm:$0xff]
    %v82 = vld [vmem:[#allocation5 + $0x108] sm:$0xff]
    %v83 = vld [vmem:[#allocation5 + $0x110] sm:$0xff]
    %v84 = vld [vmem:[#allocation5 + $0x118] sm:$0xff]
    %v85 = vld [vmem:[#allocation5 + $0x120] sm:$0xff]
    %v86 = vld [vmem:[#allocation5 + $0x128] sm:$0xff]
    %v87 = vld [vmem:[#allocation5 + $0x130] sm:$0xff]
    %v88 = vld [vmem:[#allocation5 + $0x138] sm:$0xff]
    %v89 = vld [vmem:[#allocation5 + $0x140] sm:$0xff]
    %v90 = vld [vmem:[#allocation5 + $0x148] sm:$0xff]
    %v91 = vld [vmem:[#allocation5 + $0x150] sm:$0xff]
    %v92 = vld [vmem:[#allocation5 + $0x158] sm:$0xff]
    %v93 = vld [vmem:[#allocation5 + $0x160] sm:$0xff]
    %v94 = vld [vmem:[#allocation5 + $0x168] sm:$0xff]
    %v95 = vld [vmem:[#allocation5 + $0x170] sm:$0xff]
    %v96 = vld [vmem:[#allocation5 + $0x178] sm:$0xff]
    %v97 = vld [vmem:[#allocation5 + $0x180] sm:$0xff]
    %v98 = vld [vmem:[#allocation5 + $0x188] sm:$0xff]
    %v99 = vld [vmem:[#allocation5 + $0x190] sm:$0xff]
    %v100 = vld [vmem:[#allocation5 + $0x198] sm:$0xff]
    %v101 = vld [vmem:[#allocation5 + $0x1a0] sm:$0xff]
    %v102 = vld [vmem:[#allocation5 + $0x1a8] sm:$0xff]
    %v103 = vld [vmem:[#allocation5 + $0x1b0] sm:$0xff]
    %v104 = vld [vmem:[#allocation5 + $0x1b8] sm:$0xff]
    %v105 = vld [vmem:[#allocation5 + $0x1c0] sm:$0xff]
    %v106 = vld [vmem:[#allocation5 + $0x1c8] sm:$0xff]
    %v107 = vld [vmem:[#allocation5 + $0x1d0] sm:$0xff]
    %v108 = vld [vmem:[#allocation5 + $0x1d8] sm:$0xff]
    %v109 = vld [vmem:[#allocation5 + $0x1e0] sm:$0xff]
    %v110 = vld [vmem:[#allocation5 + $0x1e8] sm:$0xff]
    %v111 = vld [vmem:[#allocation5 + $0x1f0] sm:$0xff]
    %v112 = vld [vmem:[#allocation5 + $0x1f8] sm:$0xff]
    %v113 = vld [vmem:[#allocation5 + $0x200] sm:$0xff]
    %v114 = vld [vmem:[#allocation5 + $0x208] sm:$0xff]
    %v115 = vld [vmem:[#allocation5 + $0x210] sm:$0xff]
    %v116 = vld [vmem:[#allocation5 + $0x218] sm:$0xff]
    %v117 = vld [vmem:[#allocation5 + $0x220] sm:$0xff]
    %v118 = vld [vmem:[#allocation5 + $0x228] sm:$0xff]
    %v119 = vld [vmem:[#allocation5 + $0x230] sm:$0xff]
    %v120 = vld [vmem:[#allocation5 + $0x238] sm:$0xff]
    %v121 = vld [vmem:[#allocation5 + $0x240] sm:$0xff]
    %v122 = vld [vmem:[#allocation5 + $0x248] sm:$0xff]
    %v123 = vld [vmem:[#allocation5 + $0x250] sm:$0xff]
    %v124 = vld [vmem:[#allocation5 + $0x258] sm:$0xff]
    %v125 = vld [vmem:[#allocation5 + $0x260] sm:$0xff]
    %v126 = vld [vmem:[#allocation5 + $0x268] sm:$0xff]
    %v127 = vld [vmem:[#allocation5 + $0x270] sm:$0xff]
    %v128 = vld [vmem:[#allocation5 + $0x278] sm:$0xff]
    %v129 = vld [vmem:[#allocation5 + $0x280] sm:$0xff]
    %v130 = vld [vmem:[#allocation5 + $0x288] sm:$0xff]
    %v131 = vld [vmem:[#allocation5 + $0x290] sm:$0xff]
    %v132 = vld [vmem:[#allocation5 + $0x298] sm:$0xff]
    %v133 = vld [vmem:[#allocation5 + $0x2a0] sm:$0xff]
    %v134 = vld [vmem:[#allocation5 + $0x2a8] sm:$0xff]
    %v135 = vld [vmem:[#allocation5 + $0x2b0] sm:$0xff]
    %v136 = vld [vmem:[#allocation5 + $0x2b8] sm:$0xff]
    %v137 = vld [vmem:[#allocation5 + $0x2c0] sm:$0xff]
    %v138 = vld [vmem:[#allocation5 + $0x2c8] sm:$0xff]
    %v139 = vld [vmem:[#allocation5 + $0x2d0] sm:$0xff]
    %v140 = vld [vmem:[#allocation5 + $0x2d8] sm:$0xff]
    %v141 = vld [vmem:[#allocation5 + $0x2e0] sm:$0xff]
    %v142 = vld [vmem:[#allocation5 + $0x2e8] sm:$0xff]
    %v143 = vld [vmem:[#allocation5 + $0x2f0] sm:$0xff]
    %v144 = vld [vmem:[#allocation5 + $0x2f8] sm:$0xff]
    %v145 = vld [vmem:[#allocation5 + $0x300] sm:$0xff]
    %v146 = vld [vmem:[#allocation5 + $0x308] sm:$0xff]
    %v147 = vld [vmem:[#allocation5 + $0x310] sm:$0xff]
    %v148 = vld [vmem:[#allocation5 + $0x318] sm:$0xff]
    %v149 = vld [vmem:[#allocation5 + $0x320] sm:$0xff]
    %v150 = vld [vmem:[#allocation5 + $0x328] sm:$0xff]
    %v151 = vld [vmem:[#allocation5 + $0x330] sm:$0xff]
    %v152 = vld [vmem:[#allocation5 + $0x338] sm:$0xff]
    %v153 = vld [vmem:[#allocation5 + $0x340] sm:$0xff]
    %v154 = vld [vmem:[#allocation5 + $0x348] sm:$0xff]
    %v155 = vld [vmem:[#allocation5 + $0x350] sm:$0xff]
    %v156 = vld [vmem:[#allocation5 + $0x358] sm:$0xff]
    %v157 = vld [vmem:[#allocation5 + $0x360] sm:$0xff]
    %v158 = vld [vmem:[#allocation5 + $0x368] sm:$0xff]
    %v159 = vld [vmem:[#allocation5 + $0x370] sm:$0xff]
    %v160 = vld [vmem:[#allocation5 + $0x378] sm:$0xff]
    %v161 = vld [vmem:[#allocation5 + $0x380] sm:$0xff]
    %v162 = vld [vmem:[#allocation5 + $0x388] sm:$0xff]
    %v163 = vld [vmem:[#allocation5 + $0x390] sm:$0xff]
    %v164 = vld [vmem:[#allocation5 + $0x398] sm:$0xff]
    %v165 = vld [vmem:[#allocation5 + $0x3a0] sm:$0xff]
    %v166 = vld [vmem:[#allocation5 + $0x3a8] sm:$0xff]
    %v167 = vld [vmem:[#allocation5 + $0x3b0] sm:$0xff]
    %v168 = vld [vmem:[#allocation5 + $0x3b8] sm:$0xff]
    %v169 = vld [vmem:[#allocation5 + $0x3c0] sm:$0xff]
    %v170 = vld [vmem:[#allocation5 + $0x3c8] sm:$0xff]
    %v171 = vld [vmem:[#allocation5 + $0x3d0] sm:$0xff]
    %v172 = vld [vmem:[#allocation5 + $0x3d8] sm:$0xff]
    %v173 = vld [vmem:[#allocation5 + $0x3e0] sm:$0xff]
    %v174 = vld [vmem:[#allocation5 + $0x3e8] sm:$0xff]
    %v175 = vld [vmem:[#allocation5 + $0x3f0] sm:$0xff]
    %v176 = vld [vmem:[#allocation5 + $0x3f8] sm:$0xff]
    %v177 = vld [vmem:[#allocation5 + $0x400] sm:$0xff]
    %v178 = vld [vmem:[#allocation5 + $0x408] sm:$0xff]
    %v179 = vld [vmem:[#allocation5 + $0x410] sm:$0xff]
    %v180 = vld [vmem:[#allocation5 + $0x418] sm:$0xff]
    %v181 = vld [vmem:[#allocation5 + $0x420] sm:$0xff]
    %v182 = vld [vmem:[#allocation5 + $0x428] sm:$0xff]
    %v183 = vld [vmem:[#allocation5 + $0x430] sm:$0xff]
    %v184 = vld [vmem:[#allocation5 + $0x438] sm:$0xff]
    %v185 = vld [vmem:[#allocation5 + $0x440] sm:$0xff]
    %v186 = vld [vmem:[#allocation5 + $0x448] sm:$0xff]
    %v187 = vld [vmem:[#allocation5 + $0x450] sm:$0xff]
    %v188 = vld [vmem:[#allocation5 + $0x458] sm:$0xff]
    %v189 = vld [vmem:[#allocation5 + $0x460] sm:$0xff]
    %v190 = vld [vmem:[#allocation5 + $0x468] sm:$0xff]
    %v191 = vld [vmem:[#allocation5 + $0x470] sm:$0xff]
    %v192 = vld [vmem:[#allocation5 + $0x478] sm:$0xff]
    %v193 = vld [vmem:[#allocation5 + $0x480] sm:$0xff]
    %v194 = vld [vmem:[#allocation5 + $0x488] sm:$0xff]
    %v195 = vld [vmem:[#allocation5 + $0x490] sm:$0xff]
    %v196 = vld [vmem:[#allocation5 + $0x498] sm:$0xff]
    %v197 = vld [vmem:[#allocation5 + $0x4a0] sm:$0xff]
    %v198 = vld [vmem:[#allocation5 + $0x4a8] sm:$0xff]
    %v199 = vld [vmem:[#allocation5 + $0x4b0] sm:$0xff]
    %v200 = vld [vmem:[#allocation5 + $0x4b8] sm:$0xff]
    %v201 = vld [vmem:[#allocation5 + $0x4c0] sm:$0xff]
    %v202 = vld [vmem:[#allocation5 + $0x4c8] sm:$0xff]
    %v203 = vld [vmem:[#allocation5 + $0x4d0] sm:$0xff]
    %v204 = vld [vmem:[#allocation5 + $0x4d8] sm:$0xff]
    %v205 = vld [vmem:[#allocation5 + $0x4e0] sm:$0xff]
    %v206 = vld [vmem:[#allocation5 + $0x4e8] sm:$0xff]
    %v207 = vld [vmem:[#allocation5 + $0x4f0] sm:$0xff]
    %v208 = vld [vmem:[#allocation5 + $0x4f8] sm:$0xff]
    %v209 = vld [vmem:[#allocation5 + $0x500] sm:$0xff]
    %v210 = vld [vmem:[#allocation5 + $0x508] sm:$0xff]
    %v211 = vld [vmem:[#allocation5 + $0x510] sm:$0xff]
    %v212 = vld [vmem:[#allocation5 + $0x518] sm:$0xff]
    %v213 = vld [vmem:[#allocation5 + $0x520] sm:$0xff]
    %v214 = vld [vmem:[#allocation5 + $0x528] sm:$0xff]
    %v215 = vld [vmem:[#allocation5 + $0x530] sm:$0xff]
    %v216 = vld [vmem:[#allocation5 + $0x538] sm:$0xff]
    %v217 = vld [vmem:[#allocation5 + $0x540] sm:$0xff]
    %v218 = vld [vmem:[#allocation5 + $0x548] sm:$0xff]
    %v219 = vld [vmem:[#allocation5 + $0x550] sm:$0xff]
    %v220 = vld [vmem:[#allocation5 + $0x558] sm:$0xff]
    %v221 = vld [vmem:[#allocation5 + $0x560] sm:$0xff]
    %v222 = vld [vmem:[#allocation5 + $0x568] sm:$0xff]
    %v223 = vld [vmem:[#allocation5 + $0x570] sm:$0xff]
    %v224 = vld [vmem:[#allocation5 + $0x578] sm:$0xff]
    %v225 = vld [vmem:[#allocation5 + $0x580] sm:$0xff]
    %v226 = vld [vmem:[#allocation5 + $0x588] sm:$0xff]
    %v227 = vld [vmem:[#allocation5 + $0x590] sm:$0xff]
    %v228 = vld [vmem:[#allocation5 + $0x598] sm:$0xff]
    %v229 = vld [vmem:[#allocation5 + $0x5a0] sm:$0xff]
    %v230 = vld [vmem:[#allocation5 + $0x5a8] sm:$0xff]
    %v231 = vld [vmem:[#allocation5 + $0x5b0] sm:$0xff]
    %v232 = vld [vmem:[#allocation5 + $0x5b8] sm:$0xff]
    %v233 = vld [vmem:[#allocation5 + $0x5c0] sm:$0xff]
    %v234 = vld [vmem:[#allocation5 + $0x5c8] sm:$0xff]
    %v235 = vld [vmem:[#allocation5 + $0x5d0] sm:$0xff]
    %v236 = vld [vmem:[#allocation5 + $0x5d8] sm:$0xff]
    %v237 = vld [vmem:[#allocation5 + $0x5e0] sm:$0xff]
    %v238 = vld [vmem:[#allocation5 + $0x5e8] sm:$0xff]
    %v239 = vld [vmem:[#allocation5 + $0x5f0] sm:$0xff]
    %v240 = vld [vmem:[#allocation5 + $0x5f8] sm:$0xff]
    %v241 = vld [vmem:[#allocation5 + $0x600] sm:$0xff]
    %v242 = vld [vmem:[#allocation5 + $0x608] sm:$0xff]
    %v243 = vld [vmem:[#allocation5 + $0x610] sm:$0xff]
    %v244 = vld [vmem:[#allocation5 + $0x618] sm:$0xff]
    %v245 = vld [vmem:[#allocation5 + $0x620] sm:$0xff]
    %v246 = vld [vmem:[#allocation5 + $0x628] sm:$0xff]
    %v247 = vld [vmem:[#allocation5 + $0x630] sm:$0xff]
    %v248 = vld [vmem:[#allocation5 + $0x638] sm:$0xff]
    %v249 = vld [vmem:[#allocation5 + $0x640] sm:$0xff]
    %v250 = vld [vmem:[#allocation5 + $0x648] sm:$0xff]
    %v251 = vld [vmem:[#allocation5 + $0x650] sm:$0xff]
    %v252 = vld [vmem:[#allocation5 + $0x658] sm:$0xff]
    %v253 = vld [vmem:[#allocation5 + $0x660] sm:$0xff]
    %v254 = vld [vmem:[#allocation5 + $0x668] sm:$0xff]
    %v255 = vld [vmem:[#allocation5 + $0x670] sm:$0xff]
    %v256 = vld [vmem:[#allocation5 + $0x678] sm:$0xff]
    %v257 = vld [vmem:[#allocation5 + $0x680] sm:$0xff]
    %v258 = vld [vmem:[#allocation5 + $0x688] sm:$0xff]
    %v259 = vld [vmem:[#allocation5 + $0x690] sm:$0xff]
    %v260 = vld [vmem:[#allocation5 + $0x698] sm:$0xff]
    %v261 = vld [vmem:[#allocation5 + $0x6a0] sm:$0xff]
    %v262 = vld [vmem:[#allocation5 + $0x6a8] sm:$0xff]
    %v263 = vld [vmem:[#allocation5 + $0x6b0] sm:$0xff]
    %v264 = vld [vmem:[#allocation5 + $0x6b8] sm:$0xff]
    %v265 = vld [vmem:[#allocation5 + $0x6c0] sm:$0xff]
    %v266 = vld [vmem:[#allocation5 + $0x6c8] sm:$0xff]
    %v267 = vld [vmem:[#allocation5 + $0x6d0] sm:$0xff]
    %v268 = vld [vmem:[#allocation5 + $0x6d8] sm:$0xff]
    %v269 = vld [vmem:[#allocation5 + $0x6e0] sm:$0xff]
    %v270 = vld [vmem:[#allocation5 + $0x6e8] sm:$0xff]
    %v271 = vld [vmem:[#allocation5 + $0x6f0] sm:$0xff]
    %v272 = vld [vmem:[#allocation5 + $0x6f8] sm:$0xff]
    %v273 = vld [vmem:[#allocation5 + $0x700] sm:$0xff]
    %v274 = vld [vmem:[#allocation5 + $0x708] sm:$0xff]
    %v275 = vld [vmem:[#allocation5 + $0x710] sm:$0xff]
    %v276 = vld [vmem:[#allocation5 + $0x718] sm:$0xff]
    %v277 = vld [vmem:[#allocation5 + $0x720] sm:$0xff]
    %v278 = vld [vmem:[#allocation5 + $0x728] sm:$0xff]
    %v279 = vld [vmem:[#allocation5 + $0x730] sm:$0xff]
    %v280 = vld [vmem:[#allocation5 + $0x738] sm:$0xff]
    %v281 = vld [vmem:[#allocation5 + $0x740] sm:$0xff]
    %v282 = vld [vmem:[#allocation5 + $0x748] sm:$0xff]
    %v283 = vld [vmem:[#allocation5 + $0x750] sm:$0xff]
    %v284 = vld [vmem:[#allocation5 + $0x758] sm:$0xff]
    %v285 = vld [vmem:[#allocation5 + $0x760] sm:$0xff]
    %v286 = vld [vmem:[#allocation5 + $0x768] sm:$0xff]
    %v287 = vld [vmem:[#allocation5 + $0x770] sm:$0xff]
    %v288 = vld [vmem:[#allocation5 + $0x778] sm:$0xff]
    %v289 = vld [vmem:[#allocation5 + $0x780] sm:$0xff]
    %v290 = vld [vmem:[#allocation5 + $0x788] sm:$0xff]
    %v291 = vld [vmem:[#allocation5 + $0x790] sm:$0xff]
    %v292 = vld [vmem:[#allocation5 + $0x798] sm:$0xff]
    %v293 = vld [vmem:[#allocation5 + $0x7a0] sm:$0xff]
    %v294 = vld [vmem:[#allocation5 + $0x7a8] sm:$0xff]
    %v295 = vld [vmem:[#allocation5 + $0x7b0] sm:$0xff]
    %v296 = vld [vmem:[#allocation5 + $0x7b8] sm:$0xff]
    %v297 = vld [vmem:[#allocation5 + $0x7c0] sm:$0xff]
    %v298 = vld [vmem:[#allocation5 + $0x7c8] sm:$0xff]
    %v299 = vld [vmem:[#allocation5 + $0x7d0] sm:$0xff]
    %v300 = vld [vmem:[#allocation5 + $0x7d8] sm:$0xff]
    %v301 = vld [vmem:[#allocation5 + $0x7e0] sm:$0xff]
    %v302 = vld [vmem:[#allocation5 + $0x7e8] sm:$0xff]
    %v303 = vld [vmem:[#allocation5 + $0x7f0] sm:$0xff]
    %v304 = vld [vmem:[#allocation5 + $0x7f8] sm:$0xff]
    %v305 = vld [vmem:[%s2] sm:$0x3]
    %v307 = vlaneseq
    %v308 = vshrl.u32 %v307, 7
    %v309 = vsub.s32 0, %v308
    %v310 = vrot.slane %v305, %v309
    %v311 = vlaneseq
    %v312 = vshrl.u32 %v311, 7
    %v313 = vsub.s32 1, %v312
    %v314 = vrot.slane %v305, %v313
    %317 = vmatprep.subr.mxu0 %v80
    %318 = vmatpush1.msra.mxu0 %v79
    %319 = vmatprep.subr.mxu0 %v78
    %320 = vmatpush1.msra.mxu0 %v77
    %321 = vmatprep.subr.mxu0 %v76
    %322 = vmatpush1.msra.mxu0 %v75
    %323 = vmatprep.subr.mxu0 %v74
    %324 = vmatpush1.msra.mxu0 %v73
    %325 = vmatprep.subr.mxu0 %v72
    %326 = vmatpush1.msra.mxu0 %v71
    %327 = vmatprep.subr.mxu0 %v70
    %328 = vmatpush1.msra.mxu0 %v69
    %329 = vmatprep.subr.mxu0 %v68
    %330 = vmatpush1.msra.mxu0 %v67
    %331 = vmatprep.subr.mxu0 %v66
    %332 = vmatpush1.msra.mxu0 %v65
    %333 = vmatprep.subr.mxu0 %v64
    %334 = vmatpush1.msra.mxu0 %v63
    %335 = vmatprep.subr.mxu0 %v62
    %336 = vmatpush1.msra.mxu0 %v61
    %337 = vmatprep.subr.mxu0 %v60
    %338 = vmatpush1.msra.mxu0 %v59
    %339 = vmatprep.subr.mxu0 %v58
    %340 = vmatpush1.msra.mxu0 %v57
    %341 = vmatprep.subr.mxu0 %v56
    %342 = vmatpush1.msra.mxu0 %v55
    %343 = vmatprep.subr.mxu0 %v54
    %344 = vmatpush1.msra.mxu0 %v53
    %345 = vmatprep.subr.mxu0 %v52
    %346 = vmatpush1.msra.mxu0 %v51
    %347 = vmatprep.subr.mxu0 %v50
    %348 = vmatpush1.msra.mxu0 %v49
    %349 = vmatprep.subr.mxu0 %v112
    %350 = vmatpush2.msra.mxu0 %v111
    %351 = vmatprep.subr.mxu0 %v110
    %352 = vmatpush2.msra.mxu0 %v109
    %353 = vmatprep.subr.mxu0 %v108
    %354 = vmatpush2.msra.mxu0 %v107
    %355 = vmatprep.subr.mxu0 %v106
    %356 = vmatpush2.msra.mxu0 %v105
    %357 = vmatprep.subr.mxu0 %v104
    %358 = vmatpush2.msra.mxu0 %v103
    %359 = vmatprep.subr.mxu0 %v102
    %360 = vmatpush2.msra.mxu0 %v101
    %361 = vmatprep.subr.mxu0 %v100
    %362 = vmatpush2.msra.mxu0 %v99
    %363 = vmatprep.subr.mxu0 %v98
    %364 = vmatpush2.msra.mxu0 %v97
    %365 = vmatprep.subr.mxu0 %v96
    %366 = vmatpush2.msra.mxu0 %v95
    %367 = vmatprep.subr.mxu0 %v94
    %368 = vmatpush2.msra.mxu0 %v93
    %369 = vmatprep.subr.mxu0 %v92
    %370 = vmatpush2.msra.mxu0 %v91
    %371 = vmatprep.subr.mxu0 %v90
    %372 = vmatpush2.msra.mxu0 %v89
    %373 = vmatprep.subr.mxu0 %v88
    %374 = vmatpush2.msra.mxu0 %v87
    %375 = vmatprep.subr.mxu0 %v86
    %376 = vmatpush2.msra.mxu0 %v85
    %377 = vmatprep.subr.mxu0 %v84
    %378 = vmatpush2.msra.mxu0 %v83
    %379 = vmatprep.subr.mxu0 %v82
    %380 = vmatpush2.msra.mxu0 %v81
    %381 = vmatprep.mubr.f32.mxu0 %v42
    %382 = vmatmul.mubr.f32.gmra.mxu0 %v41
    %v383 = vpop.f32.mrf.mxu0
    %v384 = vadd.f32 %v310, %v383
    %v385 = vpop.f32.mrf.mxu0
    %v386 = vadd.f32 %v314, %v385
    %387 = vdwg.mxu0
    %388 = vmatprep.subr.mxu0 %v144
    %389 = vmatpush1.msra.mxu0 %v143
    %390 = vmatprep.subr.mxu0 %v142
    %391 = vmatpush1.msra.mxu0 %v141
    %392 = vmatprep.subr.mxu0 %v140
    %393 = vmatpush1.msra.mxu0 %v139
    %394 = vmatprep.subr.mxu0 %v138
    %395 = vmatpush1.msra.mxu0 %v137
    %396 = vmatprep.subr.mxu0 %v136
    %397 = vmatpush1.msra.mxu0 %v135
    %398 = vmatprep.subr.mxu0 %v134
    %399 = vmatpush1.msra.mxu0 %v133
    %400 = vmatprep.subr.mxu0 %v132
    %401 = vmatpush1.msra.mxu0 %v131
    %402 = vmatprep.subr.mxu0 %v130
    %403 = vmatpush1.msra.mxu0 %v129
    %404 = vmatprep.subr.mxu0 %v128
    %405 = vmatpush1.msra.mxu0 %v127
    %406 = vmatprep.subr.mxu0 %v126
    %407 = vmatpush1.msra.mxu0 %v125
    %408 = vmatprep.subr.mxu0 %v124
    %409 = vmatpush1.msra.mxu0 %v123
    %410 = vmatprep.subr.mxu0 %v122
    %411 = vmatpush1.msra.mxu0 %v121
    %412 = vmatprep.subr.mxu0 %v120
    %413 = vmatpush1.msra.mxu0 %v119
    %414 = vmatprep.subr.mxu0 %v118
    %415 = vmatpush1.msra.mxu0 %v117
    %416 = vmatprep.subr.mxu0 %v116
    %417 = vmatpush1.msra.mxu0 %v115
    %418 = vmatprep.subr.mxu0 %v114
    %419 = vmatpush1.msra.mxu0 %v113
    %420 = vmatprep.subr.mxu0 %v176
    %421 = vmatpush2.msra.mxu0 %v175
    %422 = vmatprep.subr.mxu0 %v174
    %423 = vmatpush2.msra.mxu0 %v173
    %424 = vmatprep.subr.mxu0 %v172
    %425 = vmatpush2.msra.mxu0 %v171
    %426 = vmatprep.subr.mxu0 %v170
    %427 = vmatpush2.msra.mxu0 %v169
    %428 = vmatprep.subr.mxu0 %v168
    %429 = vmatpush2.msra.mxu0 %v167
    %430 = vmatprep.subr.mxu0 %v166
    %431 = vmatpush2.msra.mxu0 %v165
    %432 = vmatprep.subr.mxu0 %v164
    %433 = vmatpush2.msra.mxu0 %v163
    %434 = vmatprep.subr.mxu0 %v162
    %435 = vmatpush2.msra.mxu0 %v161
    %436 = vmatprep.subr.mxu0 %v160
    %437 = vmatpush2.msra.mxu0 %v159
    %438 = vmatprep.subr.mxu0 %v158
    %439 = vmatpush2.msra.mxu0 %v157
    %440 = vmatprep.subr.mxu0 %v156
    %441 = vmatpush2.msra.mxu0 %v155
    %442 = vmatprep.subr.mxu0 %v154
    %443 = vmatpush2.msra.mxu0 %v153
    %444 = vmatprep.subr.mxu0 %v152
    %445 = vmatpush2.msra.mxu0 %v151
    %446 = vmatprep.subr.mxu0 %v150
    %447 = vmatpush2.msra.mxu0 %v149
    %448 = vmatprep.subr.mxu0 %v148
    %449 = vmatpush2.msra.mxu0 %v147
    %450 = vmatprep.subr.mxu0 %v146
    %451 = vmatpush2.msra.mxu0 %v145
    %452 = vmatprep.mubr.f32.mxu0 %v44
    %453 = vmatmul.mubr.f32.gmra.mxu0 %v43
    %v454 = vpop.f32.mrf.mxu0
    %v455 = vadd.f32 %v384, %v454
    %v456 = vpop.f32.mrf.mxu0
    %v457 = vadd.f32 %v386, %v456
    %458 = vdwg.mxu0
    %459 = vmatprep.subr.mxu0 %v208
    %460 = vmatpush1.msra.mxu0 %v207
    %461 = vmatprep.subr.mxu0 %v206
    %462 = vmatpush1.msra.mxu0 %v205
    %463 = vmatprep.subr.mxu0 %v204
    %464 = vmatpush1.msra.mxu0 %v203
    %465 = vmatprep.subr.mxu0 %v202
    %466 = vmatpush1.msra.mxu0 %v201
    %467 = vmatprep.subr.mxu0 %v200
    %468 = vmatpush1.msra.mxu0 %v199
    %469 = vmatprep.subr.mxu0 %v198
    %470 = vmatpush1.msra.mxu0 %v197
    %471 = vmatprep.subr.mxu0 %v196
    %472 = vmatpush1.msra.mxu0 %v195
    %473 = vmatprep.subr.mxu0 %v194
    %474 = vmatpush1.msra.mxu0 %v193
    %475 = vmatprep.subr.mxu0 %v192
    %476 = vmatpush1.msra.mxu0 %v191
    %477 = vmatprep.subr.mxu0 %v190
    %478 = vmatpush1.msra.mxu0 %v189
    %479 = vmatprep.subr.mxu0 %v188
    %480 = vmatpush1.msra.mxu0 %v187
    %481 = vmatprep.subr.mxu0 %v186
    %482 = vmatpush1.msra.mxu0 %v185
    %483 = vmatprep.subr.mxu0 %v184
    %484 = vmatpush1.msra.mxu0 %v183
    %485 = vmatprep.subr.mxu0 %v182
    %486 = vmatpush1.msra.mxu0 %v181
    %487 = vmatprep.subr.mxu0 %v180
    %488 = vmatpush1.msra.mxu0 %v179
    %489 = vmatprep.subr.mxu0 %v178
    %490 = vmatpush1.msra.mxu0 %v177
    %491 = vmatprep.subr.mxu0 %v240
    %492 = vmatpush2.msra.mxu0 %v239
    %493 = vmatprep.subr.mxu0 %v238
    %494 = vmatpush2.msra.mxu0 %v237
    %495 = vmatprep.subr.mxu0 %v236
    %496 = vmatpush2.msra.mxu0 %v235
    %497 = vmatprep.subr.mxu0 %v234
    %498 = vmatpush2.msra.mxu0 %v233
    %499 = vmatprep.subr.mxu0 %v232
    %500 = vmatpush2.msra.mxu0 %v231
    %501 = vmatprep.subr.mxu0 %v230
    %502 = vmatpush2.msra.mxu0 %v229
    %503 = vmatprep.subr.mxu0 %v228
    %504 = vmatpush2.msra.mxu0 %v227
    %505 = vmatprep.subr.mxu0 %v226
    %506 = vmatpush2.msra.mxu0 %v225
    %507 = vmatprep.subr.mxu0 %v224
    %508 = vmatpush2.msra.mxu0 %v223
    %509 = vmatprep.subr.mxu0 %v222
    %510 = vmatpush2.msra.mxu0 %v221
    %511 = vmatprep.subr.mxu0 %v220
    %512 = vmatpush2.msra.mxu0 %v219
    %513 = vmatprep.subr.mxu0 %v218
    %514 = vmatpush2.msra.mxu0 %v217
    %515 = vmatprep.subr.mxu0 %v216
    %516 = vmatpush2.msra.mxu0 %v215
    %517 = vmatprep.subr.mxu0 %v214
    %518 = vmatpush2.msra.mxu0 %v213
    %519 = vmatprep.subr.mxu0 %v212
    %520 = vmatpush2.msra.mxu0 %v211
    %521 = vmatprep.subr.mxu0 %v210
    %522 = vmatpush2.msra.mxu0 %v209
    %523 = vmatprep.mubr.f32.mxu0 %v46
    %524 = vmatmul.mubr.f32.gmra.mxu0 %v45
    %v525 = vpop.f32.mrf.mxu0
    %v526 = vadd.f32 %v455, %v525
    %v527 = vpop.f32.mrf.mxu0
    %v528 = vadd.f32 %v457, %v527
    %529 = vdwg.mxu0
    %530 = vmatprep.subr.mxu0 %v272
    %531 = vmatpush1.msra.mxu0 %v271
    %532 = vmatprep.subr.mxu0 %v270
    %533 = vmatpush1.msra.mxu0 %v269
    %534 = vmatprep.subr.mxu0 %v268
    %535 = vmatpush1.msra.mxu0 %v267
    %536 = vmatprep.subr.mxu0 %v266
    %537 = vmatpush1.msra.mxu0 %v265
    %538 = vmatprep.subr.mxu0 %v264
    %539 = vmatpush1.msra.mxu0 %v263
    %540 = vmatprep.subr.mxu0 %v262
    %541 = vmatpush1.msra.mxu0 %v261
    %542 = vmatprep.subr.mxu0 %v260
    %543 = vmatpush1.msra.mxu0 %v259
    %544 = vmatprep.subr.mxu0 %v258
    %545 = vmatpush1.msra.mxu0 %v257
    %546 = vmatprep.subr.mxu0 %v256
    %547 = vmatpush1.msra.mxu0 %v255
    %548 = vmatprep.subr.mxu0 %v254
    %549 = vmatpush1.msra.mxu0 %v253
    %550 = vmatprep.subr.mxu0 %v252
    %551 = vmatpush1.msra.mxu0 %v251
    %552 = vmatprep.subr.mxu0 %v250
    %553 = vmatpush1.msra.mxu0 %v249
    %554 = vmatprep.subr.mxu0 %v248
    %555 = vmatpush1.msra.mxu0 %v247
    %556 = vmatprep.subr.mxu0 %v246
    %557 = vmatpush1.msra.mxu0 %v245
    %558 = vmatprep.subr.mxu0 %v244
    %559 = vmatpush1.msra.mxu0 %v243
    %560 = vmatprep.subr.mxu0 %v242
    %561 = vmatpush1.msra.mxu0 %v241
    %562 = vmatprep.subr.mxu0 %v304
    %563 = vmatpush2.msra.mxu0 %v303
    %564 = vmatprep.subr.mxu0 %v302
    %565 = vmatpush2.msra.mxu0 %v301
    %566 = vmatprep.subr.mxu0 %v300
    %567 = vmatpush2.msra.mxu0 %v299
    %568 = vmatprep.subr.mxu0 %v298
    %569 = vmatpush2.msra.mxu0 %v297
    %570 = vmatprep.subr.mxu0 %v296
    %571 = vmatpush2.msra.mxu0 %v295
    %572 = vmatprep.subr.mxu0 %v294
    %573 = vmatpush2.msra.mxu0 %v293
    %574 = vmatprep.subr.mxu0 %v292
    %575 = vmatpush2.msra.mxu0 %v291
    %576 = vmatprep.subr.mxu0 %v290
    %577 = vmatpush2.msra.mxu0 %v289
    %578 = vmatprep.subr.mxu0 %v288
    %579 = vmatpush2.msra.mxu0 %v287
    %580 = vmatprep.subr.mxu0 %v286
    %581 = vmatpush2.msra.mxu0 %v285
    %582 = vmatprep.subr.mxu0 %v284
    %583 = vmatpush2.msra.mxu0 %v283
    %584 = vmatprep.subr.mxu0 %v282
    %585 = vmatpush2.msra.mxu0 %v281
    %586 = vmatprep.subr.mxu0 %v280
    %587 = vmatpush2.msra.mxu0 %v279
    %588 = vmatprep.subr.mxu0 %v278
    %589 = vmatpush2.msra.mxu0 %v277
    %590 = vmatprep.subr.mxu0 %v276
    %591 = vmatpush2.msra.mxu0 %v275
    %592 = vmatprep.subr.mxu0 %v274
    %593 = vmatpush2.msra.mxu0 %v273
    %594 = vmatprep.mubr.f32.mxu0 %v48
    %595 = vmatmul.mubr.f32.gmra.mxu0 %v47
    %v596 = vpop.f32.mrf.mxu0
    %v597 = vadd.f32 %v526, %v596
    %v598 = vpop.f32.mrf.mxu0
    %v599 = vadd.f32 %v528, %v598
    %600 = vdwg.mxu0
    %v601 = vmax.f32 %v597, 0.0
    %v602 = vmax.f32 %v599, 0.0
    %603 = vst [vmem:[#allocation7] sm:$0xff] %v601
    %604 = vst [vmem:[#allocation7 + $0x8] sm:$0xff] %v602
    // Predicated region
    $region22: #{tpu_custom_call.1} parent=1 // pred_check
      _
    $region23: #{tpu_custom_call.1} parent=1 // pred_check_branch
      %606 = sbr.rel (0) target = $region25
    $region24: #{tpu_custom_call.1} parent=1 // pred_region
      %s608 = ssub.s32 256, 256
      %609 = vsyncadd [#allocation4], %s608
      %s611 = sshll.u32 [#allocation7], 4
      %s612 = int_to_ptr.vmem [resolvable:$true] %s611
      %614 = dma.vmem_to_hbm [thread:$0]  %s612, 256, %s3, [#allocation4]
    $region25: #{tpu_custom_call.1} parent=1 // pred_fallthru
      _
    // Predicated region
    $region26: #{tpu_custom_call.1} parent=1 // pred_check
      _
    $region27: #{tpu_custom_call.1} parent=1 // pred_check_branch
      %616 = sbr.rel (0) target = $region29
    $region28: #{tpu_custom_call.1} parent=1 // pred_region
      %617 = dma.done [#allocation4], 256
    $region29: #{tpu_custom_call.1} parent=1 // pred_fallthru
      _
    %618 = vsyncpa [#allocation3], 1
    %619 = vsyncpa [#allocation6], 1
    %620 = vsyncpa [#allocation4], 1

</llo_original>
